<compile_context>
chip_gen: v5e
topology: v5e:2x2
jax: 0.10.0
libtpu: 0.0.40
codegen_flags: <defaults>
</compile_context>

<pallas_src>
import jax
import jax.numpy as jnp
from jax import lax
from jax.experimental import pallas as pl
from jax.experimental.pallas import tpu as pltpu

DIM = 512
HID = 128
OUT = 2


def _round_up(a, b):
    return (a + b - 1) // b * b


def _mlp_kernel(x_ref, w1_ref, b1_ref, w2t_ref, b2t_ref, o_ref):
    # x_ref:   (tm, 512)  f32 (or bf16) row tile
    # w1_ref:  (512, 128) bf16
    # b1_ref:  (1, 128)   f32
    # w2t_ref: (2, 128)   bf16  (W2 transposed)
    # b2t_ref: (2, 1)     f32
    # o_ref:   (2, tm)    f32   (lane-dense, channel-major output)
    x_bf = x_ref[...].astype(jnp.bfloat16)            # VPU cast, hidden under tile DMA
    h = jnp.dot(x_bf, w1_ref[...], preferred_element_type=jnp.float32)   # (tm, 128) f32
    h = jnp.maximum(h + b1_ref[...], 0.0)             # ReLU
    # TODO(synk): training-mode Dropout mask not applied (inference identity).
    h_bf = h.astype(jnp.bfloat16)
    # (2,128) . (tm,128) contracting last dims -> (2, tm); no explicit h^T in VMEM.
    out_t = lax.dot_general(
        w2t_ref[...], h_bf,
        dimension_numbers=(((1,), (1,)), ((), ())),
        preferred_element_type=jnp.float32)
    o_ref[...] = (out_t + b2t_ref[...]).astype(o_ref.dtype)


def single_backbone_pretrainer_forward(x, w1, b1, w2, b2, *, tm=2048):
    """x: (B, S, 512) -> (vouts (B,S), aouts (B,S)) float32."""
    assert x.ndim == 3, x.ndim
    B, S, D = x.shape
    assert D == DIM, D
    M = B * S

    # No HBM-side dtype conversion of x (kernel casts per-tile); reshape is free.
    x2d = x.reshape(M, D)
    w1_bf = w1.astype(jnp.bfloat16)
    b1_2d = b1.reshape(1, HID).astype(jnp.float32)
    w2t_bf = jnp.transpose(w2).astype(jnp.bfloat16)    # (2, 128)
    b2t = b2.reshape(OUT, 1).astype(jnp.float32)       # (2, 1)

    # Tile selection: multiple of 128, no larger than needed; ragged tail handled by grid.
    assert tm % 128 == 0, tm
    tm = min(tm, _round_up(M, 128))
    grid = pl.cdiv(M, tm)

    x_bytes = M * D * x2d.dtype.itemsize
    cost = pl.CostEstimate(
        flops=2 * M * DIM * HID + 2 * M * HID * OUT,
        transcendentals=0,
        bytes_accessed=x_bytes + M * OUT * 4 + DIM * HID * 2 + OUT * HID * 2,
    )

    out = pl.pallas_call(
        _mlp_kernel,
        out_shape=jax.ShapeDtypeStruct((OUT, M), jnp.float32),
        grid_spec=pltpu.PrefetchScalarGridSpec(
            num_scalar_prefetch=0,
            grid=(grid,),
            in_specs=[
                pl.BlockSpec((tm, D), lambda i: (i, 0)),        # x row tile (ragged edge ok)
                pl.BlockSpec((D, HID), lambda i: (0, 0)),       # W1 (whole, bf16)
                pl.BlockSpec((1, HID), lambda i: (0, 0)),       # b1
                pl.BlockSpec((OUT, HID), lambda i: (0, 0)),     # W2^T (whole, bf16)
                pl.BlockSpec((OUT, 1), lambda i: (0, 0)),       # b2 (column)
            ],
            out_specs=pl.BlockSpec((OUT, tm), lambda i: (0, i)),  # lane-dense (2, tm)
        ),
        compiler_params=pltpu.CompilerParams(
            dimension_semantics=("parallel",),
            vmem_limit_bytes=48 * 1024 * 1024,
        ),
        cost_estimate=cost,
    )(x2d, w1_bf, b1_2d, w2t_bf, b2t)

    vouts = out[0].reshape(B, S)
    aouts = out[1].reshape(B, S)
    return vouts, aouts


def _init_params(key):
    """Deterministic parameter init mimicking nn.Linear's uniform(-1/sqrt(fan_in), ...)."""
    k1, k2, k3, k4 = jax.random.split(key, 4)
    lim1 = 1.0 / jnp.sqrt(DIM)
    lim2 = 1.0 / jnp.sqrt(HID)
    w1 = jax.random.uniform(k1, (DIM, HID), jnp.float32, -lim1, lim1)
    b1 = jax.random.uniform(k2, (HID,), jnp.float32, -lim1, lim1)
    w2 = jax.random.uniform(k3, (HID, OUT), jnp.float32, -lim2, lim2)
    b2 = jax.random.uniform(k4, (OUT,), jnp.float32, -lim2, lim2)
    return w1, b1, w2, b2


def _reference(x, w1, b1, w2, b2):
    h = jnp.maximum(jnp.einsum("bsd,dh->bsh", x, w1) + b1, 0.0)
    out = jnp.einsum("bsh,ho->bso", h, w2) + b2
    return out[..., 0], out[..., 1]


def _check(x, w1, b1, w2, b2, **kw):
    vouts, aouts = single_backbone_pretrainer_forward(x, w1, b1, w2, b2, **kw)
    jax.block_until_ready((vouts, aouts))
    v_ref, a_ref = _reference(x, w1, b1, w2, b2)
    B, S, _ = x.shape
    assert vouts.shape == (B, S) and aouts.shape == (B, S)
    # bf16 MXU operands with f32 accumulation -> slightly looser tolerance than pure f32.
    assert jnp.allclose(vouts, v_ref, atol=2e-2, rtol=2e-2)
    assert jnp.allclose(aouts, a_ref, atol=2e-2, rtol=2e-2)


if __name__ == "__main__":
    key = jax.random.PRNGKey(0)
    kx1, kx2, kp = jax.random.split(key, 3)
    w1, b1, w2, b2 = _init_params(kp)

    # Small shape consistent with the module (feature dim fixed at 512).
    x_small = jax.random.normal(kx1, (2, 8, DIM), jnp.float32)
    _check(x_small, w1, b1, w2, b2)

    # Non-divisible row count + multi-step grid (exercises ragged edge-block handling).
    x_ragged = jax.random.normal(kx2, (3, 100, DIM), jnp.float32)
    _check(x_ragged, w1, b1, w2, b2, tm=128)

    print("KERNEL_OK")
</pallas_src>

<mosaic_0001>
module attributes {stable_mosaic.version = 11 : i64} {
  func.func @_mlp_kernel(%arg0: i32, %arg1: memref<128x512xf32, #tpu.memory_space<vmem>>, %arg2: memref<512x128xbf16, #tpu.memory_space<vmem>>, %arg3: memref<1x128xf32, #tpu.memory_space<vmem>>, %arg4: memref<2x128xbf16, #tpu.memory_space<vmem>>, %arg5: memref<2x1xf32, #tpu.memory_space<vmem>>, %arg6: memref<2x128xf32, #tpu.memory_space<vmem>>) attributes {dimension_semantics = [#tpu.dimension_semantics<parallel>], iteration_bounds = array<i64: 1>, scalar_prefetch = 0 : i64, scratch_operands = 0 : i64, tpu.core_type = #tpu.core_type<tc>, window_params = [{transform_indices = @transform_0, window_bounds = array<i64: 128, 512>}, {pipeline_mode = #tpu.pipeline_mode<synchronous>, transform_indices = @transform_1, window_bounds = array<i64: 512, 128>}, {pipeline_mode = #tpu.pipeline_mode<synchronous>, transform_indices = @transform_2, window_bounds = array<i64: 1, 128>}, {pipeline_mode = #tpu.pipeline_mode<synchronous>, transform_indices = @transform_3, window_bounds = array<i64: 2, 128>}, {pipeline_mode = #tpu.pipeline_mode<synchronous>, transform_indices = @transform_4, window_bounds = array<i64: 2, 1>}, {transform_indices = @transform_5, window_bounds = array<i64: 2, 128>}]} {
    %c0 = arith.constant 0 : index
    %c0_0 = arith.constant 0 : index
    %0 = vector.load %arg1[%c0, %c0_0] : memref<128x512xf32, #tpu.memory_space<vmem>>, vector<128x512xf32>
    %1 = arith.truncf %0 : vector<128x512xf32> to vector<128x512xbf16>
    %c0_1 = arith.constant 0 : index
    %c0_2 = arith.constant 0 : index
    %2 = vector.load %arg2[%c0_1, %c0_2] : memref<512x128xbf16, #tpu.memory_space<vmem>>, vector<512x128xbf16>
    %cst = arith.constant dense<0.000000e+00> : vector<128x128xf32>
    %3 = tpu.matmul %1, %2, %cst {dimension_numbers = #tpu.dot_dimension_numbers<[1], [0], [0], [1], [0, 0, 1, 1], [], []>} : vector<128x512xbf16>, vector<512x128xbf16>, vector<128x128xf32> -> vector<128x128xf32>
    %c0_3 = arith.constant 0 : index
    %c0_4 = arith.constant 0 : index
    %4 = vector.load %arg3[%c0_3, %c0_4] : memref<1x128xf32, #tpu.memory_space<vmem>>, vector<1x128xf32>
    %5 = vector.broadcast %4 : vector<1x128xf32> to vector<128x128xf32>
    %6 = arith.addf %3, %5 : vector<128x128xf32>
    %cst_5 = arith.constant 0.000000e+00 : f32
    %7 = vector.broadcast %cst_5 : f32 to vector<128x128xf32>
    %8 = arith.maximumf %6, %7 : vector<128x128xf32>
    %9 = arith.truncf %8 : vector<128x128xf32> to vector<128x128xbf16>
    %c0_6 = arith.constant 0 : index
    %c0_7 = arith.constant 0 : index
    %10 = vector.load %arg4[%c0_6, %c0_7] : memref<2x128xbf16, #tpu.memory_space<vmem>>, vector<2x128xbf16>
    %cst_8 = arith.constant dense<0.000000e+00> : vector<2x128xf32>
    %11 = tpu.matmul %10, %9, %cst_8 {dimension_numbers = #tpu.dot_dimension_numbers<[1], [1], [0], [0], [0, 0, 1, 0], [], []>} : vector<2x128xbf16>, vector<128x128xbf16>, vector<2x128xf32> -> vector<2x128xf32>
    %c0_9 = arith.constant 0 : index
    %c0_10 = arith.constant 0 : index
    %12 = vector.load %arg5[%c0_9, %c0_10] : memref<2x1xf32, #tpu.memory_space<vmem>>, vector<2x1xf32>
    %13 = vector.broadcast %12 : vector<2x1xf32> to vector<2x128xf32>
    %14 = arith.addf %11, %13 : vector<2x128xf32>
    %c0_11 = arith.constant 0 : index
    %c0_12 = arith.constant 0 : index
    %15 = vector.load %arg6[%c0_11, %c0_12] : memref<2x128xf32, #tpu.memory_space<vmem>>, vector<2x128xf32>
    tpu.vector_store %arg6[%c0_11, %c0_12], %14 {strides = array<i32>} : memref<2x128xf32, #tpu.memory_space<vmem>>, vector<2x128xf32>,
    return
  }
  func.func @transform_0(%arg0: i32) -> (i32, i32) {
    %c0_i32 = arith.constant 0 : i32
    %c0_i32_0 = arith.constant 0 : i32
    return %arg0, %c0_i32 : i32, i32
  }
  func.func @transform_1(%arg0: i32) -> (i32, i32) {
    %c0_i32 = arith.constant 0 : i32
    %c0_i32_0 = arith.constant 0 : i32
    %c0_i32_1 = arith.constant 0 : i32
    return %c0_i32, %c0_i32_0 : i32, i32
  }
  func.func @transform_2(%arg0: i32) -> (i32, i32) {
    %c0_i32 = arith.constant 0 : i32
    %c0_i32_0 = arith.constant 0 : i32
    %c0_i32_1 = arith.constant 0 : i32
    return %c0_i32, %c0_i32_0 : i32, i32
  }
  func.func @transform_3(%arg0: i32) -> (i32, i32) {
    %c0_i32 = arith.constant 0 : i32
    %c0_i32_0 = arith.constant 0 : i32
    %c0_i32_1 = arith.constant 0 : i32
    return %c0_i32, %c0_i32_0 : i32, i32
  }
  func.func @transform_4(%arg0: i32) -> (i32, i32) {
    %c0_i32 = arith.constant 0 : i32
    %c0_i32_0 = arith.constant 0 : i32
    %c0_i32_1 = arith.constant 0 : i32
    return %c0_i32, %c0_i32_0 : i32, i32
  }
  func.func @transform_5(%arg0: i32) -> (i32, i32) {
    %c0_i32 = arith.constant 0 : i32
    %c0_i32_0 = arith.constant 0 : i32
    return %c0_i32, %arg0 : i32, i32
  }
}

</mosaic_0001>

<llo_original>
// kernel: tpu_custom_call.1
$region0: #{tpu_custom_call.1}
  #allocation0 [shape = 'u32[]', space=smem, size = 0x4, offset = 0x4, fixed_abs, tag = 'smem constant byte address 0x4 - core index']
  #allocation1 [shape = 'u32[72,128]{1,0:T(1,128)}', space=vmem, size = 0x9000, scoped, tag = 'internal scratch']
  %s0 = inlined_call_operand.hbm [shape: f32[16,512], index: 0, kind: input, shape index: {}]
  %s1 = inlined_call_operand.hbm [shape: bf16[512,128], index: 1, kind: input, shape index: {}]
  %s2 = inlined_call_operand.vmem [shape: f32[1,128], index: 2, kind: input, shape index: {}]
  %s3 = inlined_call_operand.vmem [shape: bf16[2,128], index: 3, kind: input, shape index: {}]
  %s4 = inlined_call_operand.vmem [shape: f32[2,1], index: 4, kind: input, shape index: {}]
  %s5 = inlined_call_operand.hbm [shape: f32[2,16], index: 5, kind: output, shape index: {}]
  %s6 = sld [smem:[#allocation0]]
  $region38: #{tpu_custom_call.1} parent=0
    _
  %s8 = ssub.s32 1, %s6
  %s9 = scalar_select 0, %s8, %s6
  $region1: #{tpu_custom_call.1} parent=0
    #allocation2 [shape = 'u8[262144]{0}', space=vmem, size = 0x40000, scoped, tag = 'input window, operand 0, single buffered']
    #allocation3 [shape = 's32[1]{0}', space=sflag, size = 0x4, scoped, tag = 'scoped memory for tpu_custom_call.1']
    #allocation4 [shape = 's32[1]{0}', space=sflag, size = 0x4, scoped, tag = 'scoped memory for tpu_custom_call.1']
    #allocation5 [shape = 'u8[131072]{0}', space=vmem, size = 0x20000, scoped, tag = 'input window, operand 1, single buffered']
    #allocation6 [shape = 's32[1]{0}', space=sflag, size = 0x4, scoped, tag = 'scoped memory for tpu_custom_call.1']
    #allocation7 [shape = 'u8[1024]{0}', space=vmem, size = 0x400, scoped, tag = 'output window, operand 0, single buffered']
    %10 = vsyncpa [#allocation3], 0
    %11 = vsyncpa [#allocation6], 0
    %12 = vsyncpa [#allocation4], 0
    // Predicated region
    $region2: #{tpu_custom_call.1} parent=1 // pred_check
      _
    $region3: #{tpu_custom_call.1} parent=1 // pred_check_branch
      %14 = sbr.rel (0) target = $region5
    $region4: #{tpu_custom_call.1} parent=1 // pred_region
      %16 = vsyncadd [#allocation3], 7168
      %s17 = sshll.u32 %s0, 4
      %s18 = int_to_ptr.hbm [resolvable:$true] %s17
      %s19 = sshll.u32 [#allocation2], 4
      %s20 = int_to_ptr.vmem [resolvable:$true] %s19
      %25 = dma.hbm_to_vmem [thread:$0]  %s18, 1024, %s20, [#allocation3], 512, 512, 32
    $region5: #{tpu_custom_call.1} parent=1 // pred_fallthru
      _
    // Predicated region
    $region6: #{tpu_custom_call.1} parent=1 // pred_check
      _
    $region7: #{tpu_custom_call.1} parent=1 // pred_check_branch
      %27 = sbr.rel (0) target = $region9
    $region8: #{tpu_custom_call.1} parent=1 // pred_region
      %29 = vsyncadd [#allocation6], 0
      %s30 = sshll.u32 %s1, 4
      %s31 = int_to_ptr.hbm [resolvable:$true] %s30
      %s32 = sshll.u32 [#allocation5], 4
      %s33 = int_to_ptr.vmem [resolvable:$true] %s32
      %38 = dma.hbm_to_vmem [thread:$0]  %s31, 4096, %s33, [#allocation6], 64, 64, 4
    $region9: #{tpu_custom_call.1} parent=1 // pred_fallthru
      _
    // Predicated region
    $region10: #{tpu_custom_call.1} parent=1 // pred_check
      _
    $region11: #{tpu_custom_call.1} parent=1 // pred_check_branch
      %40 = sbr.rel (0) target = $region13
    $region12: #{tpu_custom_call.1} parent=1 // pred_region
      _
    $region13: #{tpu_custom_call.1} parent=1 // pred_fallthru
      _
    // Predicated region
    $region14: #{tpu_custom_call.1} parent=1 // pred_check
      _
    $region15: #{tpu_custom_call.1} parent=1 // pred_check_branch
      %42 = sbr.rel (0) target = $region17
    $region16: #{tpu_custom_call.1} parent=1 // pred_region
      _
    $region17: #{tpu_custom_call.1} parent=1 // pred_fallthru
      _
    // Predicated region
    $region18: #{tpu_custom_call.1} parent=1 // pred_check
      _
    $region19: #{tpu_custom_call.1} parent=1 // pred_check_branch
      %44 = sbr.rel (0) target = $region21
    $region20: #{tpu_custom_call.1} parent=1 // pred_region
      _
    $region21: #{tpu_custom_call.1} parent=1 // pred_fallthru
      _
    // Predicated region
    $region22: #{tpu_custom_call.1} parent=1 // pred_check
      _
    $region23: #{tpu_custom_call.1} parent=1 // pred_check_branch
      %46 = sbr.rel (0) target = $region25
    $region24: #{tpu_custom_call.1} parent=1 // pred_region
      %48 = dma.done [#allocation3], 8192
    $region25: #{tpu_custom_call.1} parent=1 // pred_fallthru
      _
    // Predicated region
    $region26: #{tpu_custom_call.1} parent=1 // pred_check
      _
    $region27: #{tpu_custom_call.1} parent=1 // pred_check_branch
      %50 = sbr.rel (0) target = $region29
    $region28: #{tpu_custom_call.1} parent=1 // pred_region
      %52 = dma.done [#allocation6], 4096
    $region29: #{tpu_custom_call.1} parent=1 // pred_fallthru
      _
    %v53 = vld [vmem:[#allocation2] sm:$0xff]
    %v54 = vld [vmem:[#allocation2 + $0x8] sm:$0xff]
    %v55 = vld [vmem:[#allocation2 + $0x10] sm:$0xff]
    %v56 = vld [vmem:[#allocation2 + $0x18] sm:$0xff]
    %v57 = vld [vmem:[#allocation2 + $0x20] sm:$0xff]
    %v58 = vld [vmem:[#allocation2 + $0x28] sm:$0xff]
    %v59 = vld [vmem:[#allocation2 + $0x30] sm:$0xff]
    %v60 = vld [vmem:[#allocation2 + $0x38] sm:$0xff]
    %v61 = vld [vmem:[#allocation2 + $0x40] sm:$0xff]
    %v62 = vld [vmem:[#allocation2 + $0x48] sm:$0xff]
    %v63 = vld [vmem:[#allocation2 + $0x50] sm:$0xff]
    %v64 = vld [vmem:[#allocation2 + $0x58] sm:$0xff]
    %v65 = vld [vmem:[#allocation2 + $0x60] sm:$0xff]
    %v66 = vld [vmem:[#allocation2 + $0x68] sm:$0xff]
    %v67 = vld [vmem:[#allocation2 + $0x70] sm:$0xff]
    %v68 = vld [vmem:[#allocation2 + $0x78] sm:$0xff]
    %v69 = vld [vmem:[#allocation2 + $0x80] sm:$0xff]
    %v70 = vld [vmem:[#allocation2 + $0x88] sm:$0xff]
    %v71 = vld [vmem:[#allocation2 + $0x90] sm:$0xff]
    %v72 = vld [vmem:[#allocation2 + $0x98] sm:$0xff]
    %v73 = vld [vmem:[#allocation2 + $0xa0] sm:$0xff]
    %v74 = vld [vmem:[#allocation2 + $0xa8] sm:$0xff]
    %v75 = vld [vmem:[#allocation2 + $0xb0] sm:$0xff]
    %v76 = vld [vmem:[#allocation2 + $0xb8] sm:$0xff]
    %v77 = vld [vmem:[#allocation2 + $0xc0] sm:$0xff]
    %v78 = vld [vmem:[#allocation2 + $0xc8] sm:$0xff]
    %v79 = vld [vmem:[#allocation2 + $0xd0] sm:$0xff]
    %v80 = vld [vmem:[#allocation2 + $0xd8] sm:$0xff]
    %v81 = vld [vmem:[#allocation2 + $0xe0] sm:$0xff]
    %v82 = vld [vmem:[#allocation2 + $0xe8] sm:$0xff]
    %v83 = vld [vmem:[#allocation2 + $0xf0] sm:$0xff]
    %v84 = vld [vmem:[#allocation2 + $0xf8] sm:$0xff]
    %v85 = vld [vmem:[#allocation2 + $0x100] sm:$0xff]
    %v86 = vld [vmem:[#allocation2 + $0x108] sm:$0xff]
    %v87 = vld [vmem:[#allocation2 + $0x110] sm:$0xff]
    %v88 = vld [vmem:[#allocation2 + $0x118] sm:$0xff]
    %v89 = vld [vmem:[#allocation2 + $0x120] sm:$0xff]
    %v90 = vld [vmem:[#allocation2 + $0x128] sm:$0xff]
    %v91 = vld [vmem:[#allocation2 + $0x130] sm:$0xff]
    %v92 = vld [vmem:[#allocation2 + $0x138] sm:$0xff]
    %v93 = vld [vmem:[#allocation2 + $0x140] sm:$0xff]
    %v94 = vld [vmem:[#allocation2 + $0x148] sm:$0xff]
    %v95 = vld [vmem:[#allocation2 + $0x150] sm:$0xff]
    %v96 = vld [vmem:[#allocation2 + $0x158] sm:$0xff]
    %v97 = vld [vmem:[#allocation2 + $0x160] sm:$0xff]
    %v98 = vld [vmem:[#allocation2 + $0x168] sm:$0xff]
    %v99 = vld [vmem:[#allocation2 + $0x170] sm:$0xff]
    %v100 = vld [vmem:[#allocation2 + $0x178] sm:$0xff]
    %v101 = vld [vmem:[#allocation2 + $0x180] sm:$0xff]
    %v102 = vld [vmem:[#allocation2 + $0x188] sm:$0xff]
    %v103 = vld [vmem:[#allocation2 + $0x190] sm:$0xff]
    %v104 = vld [vmem:[#allocation2 + $0x198] sm:$0xff]
    %v105 = vld [vmem:[#allocation2 + $0x1a0] sm:$0xff]
    %v106 = vld [vmem:[#allocation2 + $0x1a8] sm:$0xff]
    %v107 = vld [vmem:[#allocation2 + $0x1b0] sm:$0xff]
    %v108 = vld [vmem:[#allocation2 + $0x1b8] sm:$0xff]
    %v109 = vld [vmem:[#allocation2 + $0x1c0] sm:$0xff]
    %v110 = vld [vmem:[#allocation2 + $0x1c8] sm:$0xff]
    %v111 = vld [vmem:[#allocation2 + $0x1d0] sm:$0xff]
    %v112 = vld [vmem:[#allocation2 + $0x1d8] sm:$0xff]
    %v113 = vld [vmem:[#allocation2 + $0x1e0] sm:$0xff]
    %v114 = vld [vmem:[#allocation2 + $0x1e8] sm:$0xff]
    %v115 = vld [vmem:[#allocation2 + $0x1f0] sm:$0xff]
    %v116 = vld [vmem:[#allocation2 + $0x1f8] sm:$0xff]
    %v117 = vpack.c.bf16 %v57, %v53
    %v118 = vpack.c.bf16 %v58, %v54
    %v119 = vpack.c.bf16 %v59, %v55
    %v120 = vpack.c.bf16 %v60, %v56
    %v121 = vpack.c.bf16 %v65, %v61
    %v122 = vpack.c.bf16 %v66, %v62
    %v123 = vpack.c.bf16 %v67, %v63
    %v124 = vpack.c.bf16 %v68, %v64
    %v125 = vpack.c.bf16 %v73, %v69
    %v126 = vpack.c.bf16 %v74, %v70
    %v127 = vpack.c.bf16 %v75, %v71
    %v128 = vpack.c.bf16 %v76, %v72
    %v129 = vpack.c.bf16 %v81, %v77
    %v130 = vpack.c.bf16 %v82, %v78
    %v131 = vpack.c.bf16 %v83, %v79
    %v132 = vpack.c.bf16 %v84, %v80
    %v133 = vpack.c.bf16 %v89, %v85
    %v134 = vpack.c.bf16 %v90, %v86
    %v135 = vpack.c.bf16 %v91, %v87
    %v136 = vpack.c.bf16 %v92, %v88
    %v137 = vpack.c.bf16 %v97, %v93
    %v138 = vpack.c.bf16 %v98, %v94
    %v139 = vpack.c.bf16 %v99, %v95
    %v140 = vpack.c.bf16 %v100, %v96
    %v141 = vpack.c.bf16 %v105, %v101
    %v142 = vpack.c.bf16 %v106, %v102
    %v143 = vpack.c.bf16 %v107, %v103
    %v144 = vpack.c.bf16 %v108, %v104
    %v145 = vpack.c.bf16 %v113, %v109
    %v146 = vpack.c.bf16 %v114, %v110
    %v147 = vpack.c.bf16 %v115, %v111
    %v148 = vpack.c.bf16 %v116, %v112
    %v149 = vld [vmem:[#allocation5] sm:$0xf]
    %v150 = vld [vmem:[#allocation5 + $0x4] sm:$0xf]
    %v151 = vld [vmem:[#allocation5 + $0x8] sm:$0xf]
    %v152 = vld [vmem:[#allocation5 + $0xc] sm:$0xf]
    %v153 = vld [vmem:[#allocation5 + $0x10] sm:$0xf]
    %v154 = vld [vmem:[#allocation5 + $0x14] sm:$0xf]
    %v155 = vld [vmem:[#allocation5 + $0x18] sm:$0xf]
    %v156 = vld [vmem:[#allocation5 + $0x1c] sm:$0xf]
    %v157 = vld [vmem:[#allocation5 + $0x20] sm:$0xf]
    %v158 = vld [vmem:[#allocation5 + $0x24] sm:$0xf]
    %v159 = vld [vmem:[#allocation5 + $0x28] sm:$0xf]
    %v160 = vld [vmem:[#allocation5 + $0x2c] sm:$0xf]
    %v161 = vld [vmem:[#allocation5 + $0x30] sm:$0xf]
    %v162 = vld [vmem:[#allocation5 + $0x34] sm:$0xf]
    %v163 = vld [vmem:[#allocation5 + $0x38] sm:$0xf]
    %v164 = vld [vmem:[#allocation5 + $0x3c] sm:$0xf]
    %v165 = vld [vmem:[#allocation5 + $0x40] sm:$0xf]
    %v166 = vld [vmem:[#allocation5 + $0x44] sm:$0xf]
    %v167 = vld [vmem:[#allocation5 + $0x48] sm:$0xf]
    %v168 = vld [vmem:[#allocation5 + $0x4c] sm:$0xf]
    %v169 = vld [vmem:[#allocation5 + $0x50] sm:$0xf]
    %v170 = vld [vmem:[#allocation5 + $0x54] sm:$0xf]
    %v171 = vld [vmem:[#allocation5 + $0x58] sm:$0xf]
    %v172 = vld [vmem:[#allocation5 + $0x5c] sm:$0xf]
    %v173 = vld [vmem:[#allocation5 + $0x60] sm:$0xf]
    %v174 = vld [vmem:[#allocation5 + $0x64] sm:$0xf]
    %v175 = vld [vmem:[#allocation5 + $0x68] sm:$0xf]
    %v176 = vld [vmem:[#allocation5 + $0x6c] sm:$0xf]
    %v177 = vld [vmem:[#allocation5 + $0x70] sm:$0xf]
    %v178 = vld [vmem:[#allocation5 + $0x74] sm:$0xf]
    %v179 = vld [vmem:[#allocation5 + $0x78] sm:$0xf]
    %v180 = vld [vmem:[#allocation5 + $0x7c] sm:$0xf]
    %v181 = vld [vmem:[#allocation5 + $0x80] sm:$0xf]
    %v182 = vld [vmem:[#allocation5 + $0x84] sm:$0xf]
    %v183 = vld [vmem:[#allocation5 + $0x88] sm:$0xf]
    %v184 = vld [vmem:[#allocation5 + $0x8c] sm:$0xf]
    %v185 = vld [vmem:[#allocation5 + $0x90] sm:$0xf]
    %v186 = vld [vmem:[#allocation5 + $0x94] sm:$0xf]
    %v187 = vld [vmem:[#allocation5 + $0x98] sm:$0xf]
    %v188 = vld [vmem:[#allocation5 + $0x9c] sm:$0xf]
    %v189 = vld [vmem:[#allocation5 + $0xa0] sm:$0xf]
    %v190 = vld [vmem:[#allocation5 + $0xa4] sm:$0xf]
    %v191 = vld [vmem:[#allocation5 + $0xa8] sm:$0xf]
    %v192 = vld [vmem:[#allocation5 + $0xac] sm:$0xf]
    %v193 = vld [vmem:[#allocation5 + $0xb0] sm:$0xf]
    %v194 = vld [vmem:[#allocation5 + $0xb4] sm:$0xf]
    %v195 = vld [vmem:[#allocation5 + $0xb8] sm:$0xf]
    %v196 = vld [vmem:[#allocation5 + $0xbc] sm:$0xf]
    %v197 = vld [vmem:[#allocation5 + $0xc0] sm:$0xf]
    %v198 = vld [vmem:[#allocation5 + $0xc4] sm:$0xf]
    %v199 = vld [vmem:[#allocation5 + $0xc8] sm:$0xf]
    %v200 = vld [vmem:[#allocation5 + $0xcc] sm:$0xf]
    %v201 = vld [vmem:[#allocation5 + $0xd0] sm:$0xf]
    %v202 = vld [vmem:[#allocation5 + $0xd4] sm:$0xf]
    %v203 = vld [vmem:[#allocation5 + $0xd8] sm:$0xf]
    %v204 = vld [vmem:[#allocation5 + $0xdc] sm:$0xf]
    %v205 = vld [vmem:[#allocation5 + $0xe0] sm:$0xf]
    %v206 = vld [vmem:[#allocation5 + $0xe4] sm:$0xf]
    %v207 = vld [vmem:[#allocation5 + $0xe8] sm:$0xf]
    %v208 = vld [vmem:[#allocation5 + $0xec] sm:$0xf]
    %v209 = vld [vmem:[#allocation5 + $0xf0] sm:$0xf]
    %v210 = vld [vmem:[#allocation5 + $0xf4] sm:$0xf]
    %v211 = vld [vmem:[#allocation5 + $0xf8] sm:$0xf]
    %v212 = vld [vmem:[#allocation5 + $0xfc] sm:$0xf]
    %v213 = vld [vmem:[%s2] sm:$0x1]
    %v215 = vperm.slane %v213, 0
    %v281 = vunpack.c.l.b16 %v149
    %v282 = vunpack.c.l.b16 %v150
    %v283 = vunpack.c.l.b16 %v151
    %v284 = vunpack.c.l.b16 %v152
    %v285 = vunpack.c.l.b16 %v153
    %v286 = vunpack.c.l.b16 %v154
    %v287 = vunpack.c.l.b16 %v155
    %v288 = vunpack.c.l.b16 %v156
    %v289 = vunpack.c.l.b16 %v157
    %v290 = vunpack.c.l.b16 %v158
    %v291 = vunpack.c.l.b16 %v159
    %v292 = vunpack.c.l.b16 %v160
    %v293 = vunpack.c.l.b16 %v161
    %v294 = vunpack.c.l.b16 %v162
    %v295 = vunpack.c.l.b16 %v163
    %v296 = vunpack.c.l.b16 %v164
    %v297 = vunpack.c.l.b16 %v165
    %v298 = vunpack.c.l.b16 %v166
    %v299 = vunpack.c.l.b16 %v167
    %v300 = vunpack.c.l.b16 %v168
    %v301 = vunpack.c.l.b16 %v169
    %v302 = vunpack.c.l.b16 %v170
    %v303 = vunpack.c.l.b16 %v171
    %v304 = vunpack.c.l.b16 %v172
    %v305 = vunpack.c.l.b16 %v173
    %v306 = vunpack.c.l.b16 %v174
    %v307 = vunpack.c.l.b16 %v175
    %v308 = vunpack.c.l.b16 %v176
    %v309 = vunpack.c.l.b16 %v177
    %v310 = vunpack.c.l.b16 %v178
    %v311 = vunpack.c.l.b16 %v179
    %v312 = vunpack.c.l.b16 %v180
    %v313 = vunpack.c.l.b16 %v181
    %v314 = vunpack.c.l.b16 %v182
    %v315 = vunpack.c.l.b16 %v183
    %v316 = vunpack.c.l.b16 %v184
    %v317 = vunpack.c.l.b16 %v185
    %v318 = vunpack.c.l.b16 %v186
    %v319 = vunpack.c.l.b16 %v187
    %v320 = vunpack.c.l.b16 %v188
    %v321 = vunpack.c.l.b16 %v189
    %v322 = vunpack.c.l.b16 %v190
    %v323 = vunpack.c.l.b16 %v191
    %v324 = vunpack.c.l.b16 %v192
    %v325 = vunpack.c.l.b16 %v193
    %v326 = vunpack.c.l.b16 %v194
    %v327 = vunpack.c.l.b16 %v195
    %v328 = vunpack.c.l.b16 %v196
    %v329 = vunpack.c.l.b16 %v197
    %v330 = vunpack.c.l.b16 %v198
    %v331 = vunpack.c.l.b16 %v199
    %v332 = vunpack.c.l.b16 %v200
    %v333 = vunpack.c.l.b16 %v201
    %v334 = vunpack.c.l.b16 %v202
    %v335 = vunpack.c.l.b16 %v203
    %v336 = vunpack.c.l.b16 %v204
    %v337 = vunpack.c.l.b16 %v205
    %v338 = vunpack.c.l.b16 %v206
    %v339 = vunpack.c.l.b16 %v207
    %v340 = vunpack.c.l.b16 %v208
    %v341 = vunpack.c.l.b16 %v209
    %v342 = vunpack.c.l.b16 %v210
    %v343 = vunpack.c.l.b16 %v211
    %v344 = vunpack.c.l.b16 %v212
    %v345 = vpack.c.b16 %v282, %v281
    %v346 = vpack.c.b16 %v284, %v283
    %v347 = vpack.c.b16 %v286, %v285
    %v348 = vpack.c.b16 %v288, %v287
    %v349 = vpack.c.b16 %v290, %v289
    %v350 = vpack.c.b16 %v292, %v291
    %v351 = vpack.c.b16 %v294, %v293
    %v352 = vpack.c.b16 %v296, %v295
    %v353 = vpack.c.b16 %v298, %v297
    %v354 = vpack.c.b16 %v300, %v299
    %v355 = vpack.c.b16 %v302, %v301
    %v356 = vpack.c.b16 %v304, %v303
    %v357 = vpack.c.b16 %v306, %v305
    %v358 = vpack.c.b16 %v308, %v307
    %v359 = vpack.c.b16 %v310, %v309
    %v360 = vpack.c.b16 %v312, %v311
    %v361 = vpack.c.b16 %v314, %v313
    %v362 = vpack.c.b16 %v316, %v315
    %v363 = vpack.c.b16 %v318, %v317
    %v364 = vpack.c.b16 %v320, %v319
    %v365 = vpack.c.b16 %v322, %v321
    %v366 = vpack.c.b16 %v324, %v323
    %v367 = vpack.c.b16 %v326, %v325
    %v368 = vpack.c.b16 %v328, %v327
    %v369 = vpack.c.b16 %v330, %v329
    %v370 = vpack.c.b16 %v332, %v331
    %v371 = vpack.c.b16 %v334, %v333
    %v372 = vpack.c.b16 %v336, %v335
    %v373 = vpack.c.b16 %v338, %v337
    %v374 = vpack.c.b16 %v340, %v339
    %v375 = vpack.c.b16 %v342, %v341
    %v376 = vpack.c.b16 %v344, %v343
    %409 = vmatpush.bf16.msra.mxu0 %v352
    %410 = vmatpush.bf16.msra.mxu0 %v351
    %411 = vmatpush.bf16.msra.mxu0 %v350
    %412 = vmatpush.bf16.msra.mxu0 %v349
    %413 = vmatpush.bf16.msra.mxu0 %v348
    %414 = vmatpush.bf16.msra.mxu0 %v347
    %415 = vmatpush.bf16.msra.mxu0 %v346
    %416 = vmatpush.bf16.msra.mxu0 %v345
    %417 = vmatmul.bf16.gmra.mxu0 %v117
    %v418 = vpop.f32.mrf.mxu0
    %v419 = vadd.f32 %v215, %v418
    %v420 = vpop.f32.mrf.mxu0
    %v421 = vadd.f32 %v215, %v420
    %422 = vmatmul.bf16.gmra.mxu0 %v121
    %v423 = vpop.f32.mrf.mxu0
    %v424 = vadd.f32 %v215, %v423
    %v425 = vpop.f32.mrf.mxu0
    %v426 = vadd.f32 %v215, %v425
    %427 = vmatmul.bf16.gmra.mxu0 %v125
    %v428 = vpop.f32.mrf.mxu0
    %v429 = vadd.f32 %v215, %v428
    %v430 = vpop.f32.mrf.mxu0
    %v431 = vadd.f32 %v215, %v430
    %432 = vmatmul.bf16.gmra.mxu0 %v129
    %v433 = vpop.f32.mrf.mxu0
    %v434 = vadd.f32 %v215, %v433
    %v435 = vpop.f32.mrf.mxu0
    %v436 = vadd.f32 %v215, %v435
    %437 = vmatmul.bf16.gmra.mxu0 %v133
    %v438 = vpop.f32.mrf.mxu0
    %v439 = vadd.f32 %v215, %v438
    %v440 = vpop.f32.mrf.mxu0
    %v441 = vadd.f32 %v215, %v440
    %442 = vmatmul.bf16.gmra.mxu0 %v137
    %v443 = vpop.f32.mrf.mxu0
    %v444 = vadd.f32 %v215, %v443
    %v445 = vpop.f32.mrf.mxu0
    %v446 = vadd.f32 %v215, %v445
    %447 = vmatmul.bf16.gmra.mxu0 %v141
    %v448 = vpop.f32.mrf.mxu0
    %v449 = vadd.f32 %v215, %v448
    %v450 = vpop.f32.mrf.mxu0
    %v451 = vadd.f32 %v215, %v450
    %452 = vmatmul.bf16.gmra.mxu0 %v145
    %v453 = vpop.f32.mrf.mxu0
    %v454 = vadd.f32 %v215, %v453
    %v455 = vpop.f32.mrf.mxu0
    %v456 = vadd.f32 %v215, %v455
    %457 = vdwg.mxu0
    %458 = vmatpush.bf16.msra.mxu0 %v360
    %459 = vmatpush.bf16.msra.mxu0 %v359
    %460 = vmatpush.bf16.msra.mxu0 %v358
    %461 = vmatpush.bf16.msra.mxu0 %v357
    %462 = vmatpush.bf16.msra.mxu0 %v356
    %463 = vmatpush.bf16.msra.mxu0 %v355
    %464 = vmatpush.bf16.msra.mxu0 %v354
    %465 = vmatpush.bf16.msra.mxu0 %v353
    %466 = vmatmul.bf16.gmra.mxu0 %v118
    %v467 = vpop.f32.mrf.mxu0
    %v468 = vadd.f32 %v419, %v467
    %v469 = vpop.f32.mrf.mxu0
    %v470 = vadd.f32 %v421, %v469
    %471 = vmatmul.bf16.gmra.mxu0 %v122
    %v472 = vpop.f32.mrf.mxu0
    %v473 = vadd.f32 %v424, %v472
    %v474 = vpop.f32.mrf.mxu0
    %v475 = vadd.f32 %v426, %v474
    %476 = vmatmul.bf16.gmra.mxu0 %v126
    %v477 = vpop.f32.mrf.mxu0
    %v478 = vadd.f32 %v429, %v477
    %v479 = vpop.f32.mrf.mxu0
    %v480 = vadd.f32 %v431, %v479
    %481 = vmatmul.bf16.gmra.mxu0 %v130
    %v482 = vpop.f32.mrf.mxu0
    %v483 = vadd.f32 %v434, %v482
    %v484 = vpop.f32.mrf.mxu0
    %v485 = vadd.f32 %v436, %v484
    %486 = vmatmul.bf16.gmra.mxu0 %v134
    %v487 = vpop.f32.mrf.mxu0
    %v488 = vadd.f32 %v439, %v487
    %v489 = vpop.f32.mrf.mxu0
    %v490 = vadd.f32 %v441, %v489
    %491 = vmatmul.bf16.gmra.mxu0 %v138
    %v492 = vpop.f32.mrf.mxu0
    %v493 = vadd.f32 %v444, %v492
    %v494 = vpop.f32.mrf.mxu0
    %v495 = vadd.f32 %v446, %v494
    %496 = vmatmul.bf16.gmra.mxu0 %v142
    %v497 = vpop.f32.mrf.mxu0
    %v498 = vadd.f32 %v449, %v497
    %v499 = vpop.f32.mrf.mxu0
    %v500 = vadd.f32 %v451, %v499
    %501 = vmatmul.bf16.gmra.mxu0 %v146
    %v502 = vpop.f32.mrf.mxu0
    %v503 = vadd.f32 %v454, %v502
    %v504 = vpop.f32.mrf.mxu0
    %v505 = vadd.f32 %v456, %v504
    %506 = vdwg.mxu0
    %507 = vmatpush.bf16.msra.mxu0 %v368
    %508 = vmatpush.bf16.msra.mxu0 %v367
    %509 = vmatpush.bf16.msra.mxu0 %v366
    %510 = vmatpush.bf16.msra.mxu0 %v365
    %511 = vmatpush.bf16.msra.mxu0 %v364
    %512 = vmatpush.bf16.msra.mxu0 %v363
    %513 = vmatpush.bf16.msra.mxu0 %v362
    %514 = vmatpush.bf16.msra.mxu0 %v361
    %515 = vmatmul.bf16.gmra.mxu0 %v119
    %v516 = vpop.f32.mrf.mxu0
    %v517 = vadd.f32 %v468, %v516
    %v518 = vpop.f32.mrf.mxu0
    %v519 = vadd.f32 %v470, %v518
    %520 = vmatmul.bf16.gmra.mxu0 %v123
    %v521 = vpop.f32.mrf.mxu0
    %v522 = vadd.f32 %v473, %v521
    %v523 = vpop.f32.mrf.mxu0
    %v524 = vadd.f32 %v475, %v523
    %525 = vmatmul.bf16.gmra.mxu0 %v127
    %v526 = vpop.f32.mrf.mxu0
    %v527 = vadd.f32 %v478, %v526
    %v528 = vpop.f32.mrf.mxu0
    %v529 = vadd.f32 %v480, %v528
    %530 = vmatmul.bf16.gmra.mxu0 %v131
    %v531 = vpop.f32.mrf.mxu0
    %v532 = vadd.f32 %v483, %v531
    %v533 = vpop.f32.mrf.mxu0
    %v534 = vadd.f32 %v485, %v533
    %535 = vmatmul.bf16.gmra.mxu0 %v135
    %v536 = vpop.f32.mrf.mxu0
    %v537 = vadd.f32 %v488, %v536
    %v538 = vpop.f32.mrf.mxu0
    %v539 = vadd.f32 %v490, %v538
    %540 = vmatmul.bf16.gmra.mxu0 %v139
    %v541 = vpop.f32.mrf.mxu0
    %v542 = vadd.f32 %v493, %v541
    %v543 = vpop.f32.mrf.mxu0
    %v544 = vadd.f32 %v495, %v543
    %545 = vmatmul.bf16.gmra.mxu0 %v143
    %v546 = vpop.f32.mrf.mxu0
    %v547 = vadd.f32 %v498, %v546
    %v548 = vpop.f32.mrf.mxu0
    %v549 = vadd.f32 %v500, %v548
    %550 = vmatmul.bf16.gmra.mxu0 %v147
    %v551 = vpop.f32.mrf.mxu0
    %v552 = vadd.f32 %v503, %v551
    %v553 = vpop.f32.mrf.mxu0
    %v554 = vadd.f32 %v505, %v553
    %555 = vdwg.mxu0
    %556 = vmatpush.bf16.msra.mxu0 %v376
    %557 = vmatpush.bf16.msra.mxu0 %v375
    %558 = vmatpush.bf16.msra.mxu0 %v374
    %559 = vmatpush.bf16.msra.mxu0 %v373
    %560 = vmatpush.bf16.msra.mxu0 %v372
    %561 = vmatpush.bf16.msra.mxu0 %v371
    %562 = vmatpush.bf16.msra.mxu0 %v370
    %563 = vmatpush.bf16.msra.mxu0 %v369
    %564 = vmatmul.bf16.gmra.mxu0 %v120
    %v565 = vpop.f32.mrf.mxu0
    %v566 = vadd.f32 %v517, %v565
    %v567 = vpop.f32.mrf.mxu0
    %v568 = vadd.f32 %v519, %v567
    %569 = vmatmul.bf16.gmra.mxu0 %v124
    %v570 = vpop.f32.mrf.mxu0
    %v571 = vadd.f32 %v522, %v570
    %v572 = vpop.f32.mrf.mxu0
    %v573 = vadd.f32 %v524, %v572
    %574 = vmatmul.bf16.gmra.mxu0 %v128
    %v575 = vpop.f32.mrf.mxu0
    %v576 = vadd.f32 %v527, %v575
    %v577 = vpop.f32.mrf.mxu0
    %v578 = vadd.f32 %v529, %v577
    %579 = vmatmul.bf16.gmra.mxu0 %v132
    %v580 = vpop.f32.mrf.mxu0
    %v581 = vadd.f32 %v532, %v580
    %v582 = vpop.f32.mrf.mxu0
    %v583 = vadd.f32 %v534, %v582
    %584 = vmatmul.bf16.gmra.mxu0 %v136
    %v585 = vpop.f32.mrf.mxu0
    %v586 = vadd.f32 %v537, %v585
    %v587 = vpop.f32.mrf.mxu0
    %v588 = vadd.f32 %v539, %v587
    %589 = vmatmul.bf16.gmra.mxu0 %v140
    %v590 = vpop.f32.mrf.mxu0
    %v591 = vadd.f32 %v542, %v590
    %v592 = vpop.f32.mrf.mxu0
    %v593 = vadd.f32 %v544, %v592
    %594 = vmatmul.bf16.gmra.mxu0 %v144
    %v595 = vpop.f32.mrf.mxu0
    %v596 = vadd.f32 %v547, %v595
    %v597 = vpop.f32.mrf.mxu0
    %v598 = vadd.f32 %v549, %v597
    %599 = vmatmul.bf16.gmra.mxu0 %v148
    %v600 = vpop.f32.mrf.mxu0
    %v601 = vadd.f32 %v552, %v600
    %v602 = vpop.f32.mrf.mxu0
    %v603 = vadd.f32 %v554, %v602
    %604 = vdwg.mxu0
    %v605 = vmax.f32 %v566, 0.0
    %v606 = vmax.f32 %v568, 0.0
    %v607 = vmax.f32 %v571, 0.0
    %v608 = vmax.f32 %v573, 0.0
    %v609 = vmax.f32 %v576, 0.0
    %v610 = vmax.f32 %v578, 0.0
    %v611 = vmax.f32 %v581, 0.0
    %v612 = vmax.f32 %v583, 0.0
    %v613 = vmax.f32 %v586, 0.0
    %v614 = vmax.f32 %v588, 0.0
    %v615 = vmax.f32 %v591, 0.0
    %v616 = vmax.f32 %v593, 0.0
    %v617 = vmax.f32 %v596, 0.0
    %v618 = vmax.f32 %v598, 0.0
    %v619 = vmax.f32 %v601, 0.0
    %v620 = vmax.f32 %v603, 0.0
    %v621 = vpack.c.bf16 %v606, %v605
    %v622 = vpack.c.bf16 %v608, %v607
    %v623 = vpack.c.bf16 %v610, %v609
    %v624 = vpack.c.bf16 %v612, %v611
    %v625 = vpack.c.bf16 %v614, %v613
    %v626 = vpack.c.bf16 %v616, %v615
    %v627 = vpack.c.bf16 %v618, %v617
    %v628 = vpack.c.bf16 %v620, %v619
    %v629 = vld [vmem:[%s3] sm:$0x1]
    %v630 = vld [vmem:[%s4] sm:$0x3]
    %632 = vset.pattern.permute.xlu0 0
    %633 = vperm.xlu0 %632, %v630
    %v634 = vpop.permute.xlu0 %633
    %636 = vmatpush.bf16.xpose.msra.mxu0 %v628
    %637 = vmatpush.bf16.xpose.msra.mxu0 %v627
    %638 = vmatpush.bf16.xpose.msra.mxu0 %v626
    %639 = vmatpush.bf16.xpose.msra.mxu0 %v625
    %640 = vmatpush.bf16.xpose.msra.mxu0 %v624
    %641 = vmatpush.bf16.xpose.msra.mxu0 %v623
    %642 = vmatpush.bf16.xpose.msra.mxu0 %v622
    %643 = vmatpush.bf16.xpose.msra.mxu0 %v621
    %644 = vmatmul.bf16.gmra.mxu0 %v629
    %v645 = vpop.f32.mrf.mxu0
    %v646 = vadd.f32 %v634, %v645
    %v647 = vpop.f32.mrf.mxu0
    %648 = vdwg.mxu0
    %649 = vst [vmem:[#allocation7] sm:$0x3] %v646
    // Predicated region
    $region30: #{tpu_custom_call.1} parent=1 // pred_check
      _
    $region31: #{tpu_custom_call.1} parent=1 // pred_check_branch
      %651 = sbr.rel (0) target = $region33
    $region32: #{tpu_custom_call.1} parent=1 // pred_region
      %653 = vsyncadd [#allocation4], 0
      %s655 = sshll.u32 [#allocation7], 4
      %s656 = int_to_ptr.vmem [resolvable:$true] %s655
      %s657 = sshll.u32 %s5, 4
      %s658 = int_to_ptr.hbm [resolvable:$true] %s657
      %660 = dma.vmem_to_hbm [thread:$0]  %s656, 32, %s658, [#allocation4]
    $region33: #{tpu_custom_call.1} parent=1 // pred_fallthru
      _
    // Predicated region
    $region34: #{tpu_custom_call.1} parent=1 // pred_check
      _
    $region35: #{tpu_custom_call.1} parent=1 // pred_check_branch
      %662 = sbr.rel (0) target = $region37
    $region36: #{tpu_custom_call.1} parent=1 // pred_region
      %664 = dma.done [#allocation4], 32
    $region37: #{tpu_custom_call.1} parent=1 // pred_fallthru
      _
    %665 = vsyncpa [#allocation3], 1
    %666 = vsyncpa [#allocation6], 1
    %667 = vsyncpa [#allocation4], 1

</llo_original>
